<compile_context>
chip_gen: v7x
topology: tpu7x:2x2x1
jax: 0.10.0
libtpu: 0.0.40
codegen_flags: <defaults>
</compile_context>

<pallas_src>
import numpy as np
import jax
import jax.numpy as jnp
from jax import lax
from jax.experimental import pallas as pl
from jax.experimental.pallas import tpu as pltpu


def _embedding_kernel(idx_ref, emb_ref, out_ref):
    """idx_ref: VMEM (TB*F, 1)  int32   flattened, already-offset indices for this batch tile
       emb_ref: VMEM (V, E)     float32 full embedding table (small vocab -> resident)
       out_ref: VMEM (TB*F, E)  float32 row-major output tile (row b*F + f = emb[idx[b, f]])"""
    n = idx_ref.shape[0]
    V, E = emb_ref.shape

    # One fused full-width compare: exact 0/1 one-hot over the vocab, vocab on the lane axis.
    iota_v = lax.broadcasted_iota(jnp.int32, (n, V), 1)
    onehot = (idx_ref[...] == iota_v).astype(emb_ref.dtype)          # (TB*F, V)

    # Single MXU contraction; HIGHEST precision keeps the f32 table rows bit-exact under the
    # one-hot weights (each output element is 1.0 * table value).
    rows = jnp.dot(
        onehot,
        emb_ref[...],
        preferred_element_type=jnp.float32,
        precision=lax.Precision.HIGHEST,
    )                                                                 # (TB*F, E)

    out_ref[...] = rows.astype(out_ref.dtype)                         # one contiguous store


def _pick_batch_tile(batch):
    # Largest sublane-aligned tile that divides the batch (amortises per-step overhead on
    # single-TC v5e/v6e); fall back to the full batch (always a legal block).
    tb = batch
    for cand in (1024, 512, 256, 128, 64, 32, 16, 8):
        if batch % cand == 0:
            tb = cand
            break
    # v7x: the batch axis is marked "parallel" — make sure there are >= 2 grid steps so the
    # second TensorCore gets work, while keeping tiles sublane-aligned and large.
    if batch // tb == 1 and tb % 16 == 0:
        tb //= 2
    return tb


def feature_embedding(x, emb_table, offsets):
    """x: (B, F) integer field indices; emb_table: (V, E) float32; offsets: (F,) int32.
       Returns (B, F, E) float32, matching PyTorch Feature_Embedding.forward."""
    B, F = x.shape
    V, E = emb_table.shape
    tb = _pick_batch_tile(B)
    grid = (B // tb,)

    # Field-aware offset add folded into the wrapper (the `x + offset` of forward()), then
    # flattened so batch*field lands on the sublane axis of the kernel's index block.
    idx_flat = (x.astype(jnp.int32) + offsets.astype(jnp.int32)[None, :]).reshape(B * F, 1)

    itemsize = jnp.dtype(emb_table.dtype).itemsize
    cost = pl.CostEstimate(
        flops=2 * B * F * V * E,                          # one-hot MXU contraction
        transcendentals=0,
        bytes_accessed=B * F * E * itemsize + B * F * 4 + V * E * itemsize,
    )

    out = pl.pallas_call(
        _embedding_kernel,
        out_shape=jax.ShapeDtypeStruct((B * F, E), emb_table.dtype),
        grid_spec=pltpu.PrefetchScalarGridSpec(
            num_scalar_prefetch=0,
            grid=grid,
            in_specs=[
                pl.BlockSpec((tb * F, 1), lambda i: (i, 0)),   # batch tile of flattened indices
                pl.BlockSpec((V, E), lambda i: (0, 0)),        # full table, constant index_map
            ],
            out_specs=pl.BlockSpec((tb * F, E), lambda i: (i, 0)),
        ),
        compiler_params=pltpu.CompilerParams(
            # batch tiles are independent -> megacore sharding on v7x, neutral on v5e/v6e
            dimension_semantics=("parallel",),
        ),
        cost_estimate=cost,
    )(idx_flat, emb_table)

    # Row-major contiguous -> free metadata reshape in the wrapper.
    return out.reshape(B, F, E)


if __name__ == "__main__":
    # Module config (small, consistent with the PyTorch __init__).
    field_dims = [3, 4, 5, 4]                 # sum = 16 total features
    emb_size = 32
    batch = 8
    num_fields = len(field_dims)
    vocab = int(np.sum(field_dims))

    key = jax.random.PRNGKey(0)
    k_emb, k_x = jax.random.split(key)

    # Deterministic Xavier-uniform init of the embedding weight (as nn.init.xavier_uniform_)
    bound = float(np.sqrt(6.0 / (vocab + emb_size)))
    emb_table = jax.random.uniform(
        k_emb, (vocab, emb_size), dtype=jnp.float32, minval=-bound, maxval=bound
    )

    # offset = (0, cumsum(field_dims)[:-1])
    offsets = jnp.array(
        np.concatenate(([0], np.cumsum(field_dims)[:-1])), dtype=jnp.int32
    )

    # Per-field valid indices: x[:, f] in [0, field_dims[f])
    maxvals = jnp.array(field_dims, dtype=jnp.int32)[None, :]
    x = jax.random.randint(k_x, (batch, num_fields), 0, 2 ** 30, dtype=jnp.int32) % maxvals

    out = feature_embedding(x, emb_table, offsets)
    out = jax.block_until_ready(out)

    # Reference check (plain JAX) against the Pallas kernel
    ref = jnp.take(emb_table, x + offsets[None, :], axis=0)
    assert out.shape == (batch, num_fields, emb_size)
    assert jnp.allclose(out, ref), "mismatch vs reference embedding lookup"

    print("KERNEL_OK")
</pallas_src>

<mosaic_0001>
module attributes {stable_mosaic.version = 11 : i64} {
  func.func @_embedding_kernel(%arg0: i32, %arg1: memref<32x1xi32, #tpu.memory_space<vmem>>, %arg2: memref<16x32xf32, #tpu.memory_space<vmem>>, %arg3: memref<32x32xf32, #tpu.memory_space<vmem>>) attributes {dimension_semantics = [#tpu.dimension_semantics<parallel>], iteration_bounds = array<i64: 1>, scalar_prefetch = 0 : i64, scratch_operands = 0 : i64, tpu.core_type = #tpu.core_type<tc>, window_params = [{transform_indices = @transform_0, window_bounds = array<i64: 32, 1>}, {pipeline_mode = #tpu.pipeline_mode<synchronous>, transform_indices = @transform_1, window_bounds = array<i64: 16, 32>}, {transform_indices = @transform_2, window_bounds = array<i64: 32, 32>}]} {
    %0 = tpu.iota {dimensions = array<i32: 1>} : vector<32x16xi32>
    %c0 = arith.constant 0 : index
    %c0_0 = arith.constant 0 : index
    %1 = vector.load %arg1[%c0, %c0_0] : memref<32x1xi32, #tpu.memory_space<vmem>>, vector<32x1xi32>
    %2 = vector.broadcast %1 : vector<32x1xi32> to vector<32x16xi32>
    %3 = arith.cmpi eq, %2, %0 : vector<32x16xi32>
    %4 = arith.extui %3 : vector<32x16xi1> to vector<32x16xi32>
    %5 = arith.sitofp %4 : vector<32x16xi32> to vector<32x16xf32>
    %c0_1 = arith.constant 0 : index
    %c0_2 = arith.constant 0 : index
    %6 = vector.load %arg2[%c0_1, %c0_2] : memref<16x32xf32, #tpu.memory_space<vmem>>, vector<16x32xf32>
    %cst = arith.constant dense<0.000000e+00> : vector<32x32xf32>
    %7 = tpu.matmul %5, %6, %cst {dimension_numbers = #tpu.dot_dimension_numbers<[1], [0], [0], [1], [0, 0, 1, 1], [], []>, precision = #tpu.contract_precision<fp32>} : vector<32x16xf32>, vector<16x32xf32>, vector<32x32xf32> -> vector<32x32xf32>
    %c0_3 = arith.constant 0 : index
    %c0_4 = arith.constant 0 : index
    %8 = vector.load %arg3[%c0_3, %c0_4] : memref<32x32xf32, #tpu.memory_space<vmem>>, vector<32x32xf32>
    tpu.vector_store %arg3[%c0_3, %c0_4], %7 {strides = array<i32>} : memref<32x32xf32, #tpu.memory_space<vmem>>, vector<32x32xf32>,
    return
  }
  func.func @transform_0(%arg0: i32) -> (i32, i32) {
    %c0_i32 = arith.constant 0 : i32
    %c0_i32_0 = arith.constant 0 : i32
    return %arg0, %c0_i32 : i32, i32
  }
  func.func @transform_1(%arg0: i32) -> (i32, i32) {
    %c0_i32 = arith.constant 0 : i32
    %c0_i32_0 = arith.constant 0 : i32
    %c0_i32_1 = arith.constant 0 : i32
    return %c0_i32, %c0_i32_0 : i32, i32
  }
  func.func @transform_2(%arg0: i32) -> (i32, i32) {
    %c0_i32 = arith.constant 0 : i32
    %c0_i32_0 = arith.constant 0 : i32
    return %arg0, %c0_i32 : i32, i32
  }
}

</mosaic_0001>

<llo_original>
// kernel: tpu_custom_call.1
$region0: #{tpu_custom_call.1}
  #allocation0 [shape = 'u32[]', space=smem, size = 0x4, offset = 0x4, fixed_abs, tag = 'smem constant byte address 0x4 - core index']
  #allocation1 [shape = 'u32[144,128]{1,0:T(1,128)}', space=vmem, size = 0x12000, scoped, tag = 'internal scratch']
  %s0 = inlined_call_operand.vmem [shape: s32[32,1], index: 0, kind: input, shape index: {}]
  %s1 = inlined_call_operand.vmem [shape: f32[16,32], index: 1, kind: input, shape index: {}]
  %s2 = inlined_call_operand.hbm [shape: f32[32,32], index: 2, kind: output, shape index: {}]
  %s3 = sld [smem:[#allocation0]]
  $region18: #{tpu_custom_call.1} parent=0
    _
  %s5 = ssub.s32 1, %s3
  %s6 = scalar_select 0, %s5, %s3
  $region1: #{tpu_custom_call.1} parent=0
    #allocation2 [shape = 'u8[16384]{0}', space=vmem, size = 0x4000, scoped, tag = 'output window, operand 0, single buffered']
    #allocation3 [shape = 's32[1]{0}', space=sflag, size = 0x4, scoped, tag = 'scoped memory for tpu_custom_call.1']
    %7 = vsyncpa [#allocation3], 0
    // Predicated region
    $region2: #{tpu_custom_call.1} parent=1 // pred_check
      _
    $region3: #{tpu_custom_call.1} parent=1 // pred_check_branch
      %9 = sbr.rel (0) target = $region5
    $region4: #{tpu_custom_call.1} parent=1 // pred_region
      _
    $region5: #{tpu_custom_call.1} parent=1 // pred_fallthru
      _
    // Predicated region
    $region6: #{tpu_custom_call.1} parent=1 // pred_check
      _
    $region7: #{tpu_custom_call.1} parent=1 // pred_check_branch
      %11 = sbr.rel (0) target = $region9
    $region8: #{tpu_custom_call.1} parent=1 // pred_region
      _
    $region9: #{tpu_custom_call.1} parent=1 // pred_fallthru
      _
    %v12 = vlaneseq
    %v13 = vand.u32 %v12, 127
    %v14 = vld [vmem:[%s0] sm:$0xff]
    %v15 = vld [vmem:[%s0 + $0x8] sm:$0xff]
    %v16 = vld [vmem:[%s0 + $0x10] sm:$0xff]
    %v17 = vld [vmem:[%s0 + $0x18] sm:$0xff]
    %18 = vset.pattern.permute.xlu0 0
    %19 = vperm.xlu0 %18, %v14
    %v20 = vpop.permute.xlu0 %19
    %21 = vset.pattern.permute.xlu0 0
    %22 = vperm.xlu0 %21, %v15
    %v23 = vpop.permute.xlu0 %22
    %24 = vset.pattern.permute.xlu0 0
    %25 = vperm.xlu0 %24, %v16
    %v26 = vpop.permute.xlu0 %25
    %27 = vset.pattern.permute.xlu0 0
    %28 = vperm.xlu0 %27, %v17
    %v29 = vpop.permute.xlu0 %28
    %vm30 = vcmp.eq.s32.totalorder %v20, %v13
    %vm31 = vcmp.eq.s32.totalorder %v23, %v13
    %vm32 = vcmp.eq.s32.totalorder %v26, %v13
    %vm33 = vcmp.eq.s32.totalorder %v29, %v13
    %v34 = vsel %vm30, 1, 0
    %v35 = vsel %vm31, 1, 0
    %v36 = vsel %vm32, 1, 0
    %v37 = vsel %vm33, 1, 0
    %v38 = vcvt.s32.f32 %v34
    %v39 = vcvt.s32.f32 %v35
    %v40 = vcvt.s32.f32 %v36
    %v41 = vcvt.s32.f32 %v37
    %v42 = vld [vmem:[%s1] sm:$0xff]
    %v43 = vld [vmem:[%s1 + $0x8] sm:$0xff]
    %vm44 = vcmask 130048
    %v46 = vsel %vm44, %v38, 0
    %v49 = vsel %vm44, %v39, 0
    %v52 = vsel %vm44, %v40, 0
    %v55 = vsel %vm44, %v41, 0
    %57 = vmatprep.subr.mxu0 0.0
    %v58 = vand.u32 %v42, 4294901760
    %59 = vmatpush1.msra.mxu0 %v58
    %60 = vmatprep.subr.mxu0 0.0
    %v61 = vand.u32 %v43, 4294901760
    %62 = vmatpush1.msra.mxu0 %v61
    %63 = vmatprep.subr.mxu0 0.0
    %64 = vmatpush1.msra.mxu0 0.0
    %65 = vmatprep.subr.mxu0 0.0
    %66 = vmatpush1.msra.mxu0 0.0
    %67 = vmatprep.subr.mxu0 0.0
    %68 = vmatpush1.msra.mxu0 0.0
    %69 = vmatprep.subr.mxu0 0.0
    %70 = vmatpush1.msra.mxu0 0.0
    %71 = vmatprep.subr.mxu0 0.0
    %72 = vmatpush1.msra.mxu0 0.0
    %73 = vmatprep.subr.mxu0 0.0
    %74 = vmatpush1.msra.mxu0 0.0
    %75 = vmatprep.subr.mxu0 0.0
    %76 = vmatpush1.msra.mxu0 0.0
    %77 = vmatprep.subr.mxu0 0.0
    %78 = vmatpush1.msra.mxu0 0.0
    %79 = vmatprep.subr.mxu0 0.0
    %80 = vmatpush1.msra.mxu0 0.0
    %81 = vmatprep.subr.mxu0 0.0
    %82 = vmatpush1.msra.mxu0 0.0
    %83 = vmatprep.subr.mxu0 0.0
    %84 = vmatpush1.msra.mxu0 0.0
    %85 = vmatprep.subr.mxu0 0.0
    %86 = vmatpush1.msra.mxu0 0.0
    %87 = vmatprep.subr.mxu0 0.0
    %88 = vmatpush1.msra.mxu0 0.0
    %89 = vmatprep.subr.mxu0 0.0
    %90 = vmatpush1.msra.mxu0 0.0
    %91 = vmatprep.subr.mxu0 0.0
    %92 = vmatpush1.msra.mxu0 0.0
    %93 = vmatprep.subr.mxu0 0.0
    %94 = vmatpush1.msra.mxu0 0.0
    %95 = vmatprep.subr.mxu0 0.0
    %96 = vmatpush1.msra.mxu0 0.0
    %97 = vmatprep.subr.mxu0 0.0
    %98 = vmatpush1.msra.mxu0 0.0
    %99 = vmatprep.subr.mxu0 0.0
    %100 = vmatpush1.msra.mxu0 0.0
    %101 = vmatprep.subr.mxu0 0.0
    %102 = vmatpush1.msra.mxu0 0.0
    %103 = vmatprep.subr.mxu0 0.0
    %104 = vmatpush1.msra.mxu0 0.0
    %105 = vmatprep.subr.mxu0 0.0
    %106 = vmatpush1.msra.mxu0 0.0
    %107 = vmatprep.subr.mxu0 0.0
    %108 = vmatpush1.msra.mxu0 0.0
    %109 = vmatprep.subr.mxu0 0.0
    %110 = vmatpush1.msra.mxu0 0.0
    %111 = vmatprep.subr.mxu0 0.0
    %112 = vmatpush1.msra.mxu0 0.0
    %113 = vmatprep.subr.mxu0 0.0
    %114 = vmatpush1.msra.mxu0 0.0
    %115 = vmatprep.subr.mxu0 0.0
    %116 = vmatpush1.msra.mxu0 0.0
    %117 = vmatprep.subr.mxu0 0.0
    %118 = vmatpush1.msra.mxu0 0.0
    %119 = vmatprep.subr.mxu0 0.0
    %120 = vmatpush1.msra.mxu0 0.0
    %121 = vmatprep.subr.mxu0 0.0
    %122 = vmatpush1.msra.mxu0 0.0
    %123 = vmatprep.mubr.f32.mxu0 0.0
    %v124 = vand.u32 %v46, 4294901760
    %v125 = vsub.f32 %v46, %v124
    %v126 = vand.u32 %v125, 4294901760
    %v127 = vsub.f32 %v125, %v126
    %v128 = vand.u32 %v127, 4294901760
    %129 = vmatmul.mubr.f32.gmra.mrb[0].mxu0 %v128
    %v130 = vpop.f32.mrb[0].mxu0
    %v131 = vadd.f32 0.0, %v130
    %v132 = vpop.f32.mrb[0].mxu0
    %133 = vmatprep.mubr.f32.mxu0 0.0
    %v134 = vand.u32 %v49, 4294901760
    %v135 = vsub.f32 %v49, %v134
    %v136 = vand.u32 %v135, 4294901760
    %v137 = vsub.f32 %v135, %v136
    %v138 = vand.u32 %v137, 4294901760
    %139 = vmatmul.mubr.f32.gmra.mrb[0].mxu0 %v138
    %v140 = vpop.f32.mrb[0].mxu0
    %v141 = vadd.f32 0.0, %v140
    %v142 = vpop.f32.mrb[0].mxu0
    %143 = vmatprep.mubr.f32.mxu0 0.0
    %v144 = vand.u32 %v52, 4294901760
    %v145 = vsub.f32 %v52, %v144
    %v146 = vand.u32 %v145, 4294901760
    %v147 = vsub.f32 %v145, %v146
    %v148 = vand.u32 %v147, 4294901760
    %149 = vmatmul.mubr.f32.gmra.mrb[0].mxu0 %v148
    %v150 = vpop.f32.mrb[0].mxu0
    %v151 = vadd.f32 0.0, %v150
    %v152 = vpop.f32.mrb[0].mxu0
    %153 = vmatprep.mubr.f32.mxu0 0.0
    %v154 = vand.u32 %v55, 4294901760
    %v155 = vsub.f32 %v55, %v154
    %v156 = vand.u32 %v155, 4294901760
    %v157 = vsub.f32 %v155, %v156
    %v158 = vand.u32 %v157, 4294901760
    %159 = vmatmul.mubr.f32.gmra.mrb[0].mxu0 %v158
    %v160 = vpop.f32.mrb[0].mxu0
    %v161 = vadd.f32 0.0, %v160
    %v162 = vpop.f32.mrb[0].mxu0
    %163 = vdwg.mxu0
    %164 = vmatprep.subr.mxu0 0.0
    %v165 = vand.u32 %v42, 4294901760
    %v166 = vsub.f32 %v42, %v165
    %v167 = vand.u32 %v166, 4294901760
    %v168 = vsub.f32 %v166, %v167
    %v169 = vand.u32 %v168, 4294901760
    %170 = vmatpush1.msra.mxu0 %v169
    %171 = vmatprep.subr.mxu0 0.0
    %v172 = vand.u32 %v43, 4294901760
    %v173 = vsub.f32 %v43, %v172
    %v174 = vand.u32 %v173, 4294901760
    %v175 = vsub.f32 %v173, %v174
    %v176 = vand.u32 %v175, 4294901760
    %177 = vmatpush1.msra.mxu0 %v176
    %178 = vmatprep.subr.mxu0 0.0
    %179 = vmatpush1.msra.mxu0 0.0
    %180 = vmatprep.subr.mxu0 0.0
    %181 = vmatpush1.msra.mxu0 0.0
    %182 = vmatprep.subr.mxu0 0.0
    %183 = vmatpush1.msra.mxu0 0.0
    %184 = vmatprep.subr.mxu0 0.0
    %185 = vmatpush1.msra.mxu0 0.0
    %186 = vmatprep.subr.mxu0 0.0
    %187 = vmatpush1.msra.mxu0 0.0
    %188 = vmatprep.subr.mxu0 0.0
    %189 = vmatpush1.msra.mxu0 0.0
    %190 = vmatprep.subr.mxu0 0.0
    %191 = vmatpush1.msra.mxu0 0.0
    %192 = vmatprep.subr.mxu0 0.0
    %193 = vmatpush1.msra.mxu0 0.0
    %194 = vmatprep.subr.mxu0 0.0
    %195 = vmatpush1.msra.mxu0 0.0
    %196 = vmatprep.subr.mxu0 0.0
    %197 = vmatpush1.msra.mxu0 0.0
    %198 = vmatprep.subr.mxu0 0.0
    %199 = vmatpush1.msra.mxu0 0.0
    %200 = vmatprep.subr.mxu0 0.0
    %201 = vmatpush1.msra.mxu0 0.0
    %202 = vmatprep.subr.mxu0 0.0
    %203 = vmatpush1.msra.mxu0 0.0
    %204 = vmatprep.subr.mxu0 0.0
    %205 = vmatpush1.msra.mxu0 0.0
    %206 = vmatprep.subr.mxu0 0.0
    %207 = vmatpush1.msra.mxu0 0.0
    %208 = vmatprep.subr.mxu0 0.0
    %209 = vmatpush1.msra.mxu0 0.0
    %210 = vmatprep.subr.mxu0 0.0
    %211 = vmatpush1.msra.mxu0 0.0
    %212 = vmatprep.subr.mxu0 0.0
    %213 = vmatpush1.msra.mxu0 0.0
    %214 = vmatprep.subr.mxu0 0.0
    %215 = vmatpush1.msra.mxu0 0.0
    %216 = vmatprep.subr.mxu0 0.0
    %217 = vmatpush1.msra.mxu0 0.0
    %218 = vmatprep.subr.mxu0 0.0
    %219 = vmatpush1.msra.mxu0 0.0
    %220 = vmatprep.subr.mxu0 0.0
    %221 = vmatpush1.msra.mxu0 0.0
    %222 = vmatprep.subr.mxu0 0.0
    %223 = vmatpush1.msra.mxu0 0.0
    %224 = vmatprep.subr.mxu0 0.0
    %225 = vmatpush1.msra.mxu0 0.0
    %226 = vmatprep.subr.mxu0 0.0
    %227 = vmatpush1.msra.mxu0 0.0
    %228 = vmatprep.subr.mxu0 0.0
    %229 = vmatpush1.msra.mxu0 0.0
    %230 = vmatprep.subr.mxu0 0.0
    %231 = vmatpush1.msra.mxu0 0.0
    %232 = vmatprep.subr.mxu0 0.0
    %233 = vmatpush1.msra.mxu0 0.0
    %234 = vmatprep.subr.mxu0 0.0
    %235 = vmatpush1.msra.mxu0 0.0
    %236 = vmatprep.subr.mxu0 0.0
    %237 = vmatpush1.msra.mxu0 0.0
    %238 = vmatprep.mubr.f32.mxu0 0.0
    %v239 = vand.u32 %v46, 4294901760
    %240 = vmatmul.mubr.f32.gmra.mrb[0].mxu0 %v239
    %v241 = vpop.f32.mrb[0].mxu0
    %v242 = vadd.f32 %v131, %v241
    %v243 = vpop.f32.mrb[0].mxu0
    %244 = vmatprep.mubr.f32.mxu0 0.0
    %v245 = vand.u32 %v49, 4294901760
    %246 = vmatmul.mubr.f32.gmra.mrb[0].mxu0 %v245
    %v247 = vpop.f32.mrb[0].mxu0
    %v248 = vadd.f32 %v141, %v247
    %v249 = vpop.f32.mrb[0].mxu0
    %250 = vmatprep.mubr.f32.mxu0 0.0
    %v251 = vand.u32 %v52, 4294901760
    %252 = vmatmul.mubr.f32.gmra.mrb[0].mxu0 %v251
    %v253 = vpop.f32.mrb[0].mxu0
    %v254 = vadd.f32 %v151, %v253
    %v255 = vpop.f32.mrb[0].mxu0
    %256 = vmatprep.mubr.f32.mxu0 0.0
    %v257 = vand.u32 %v55, 4294901760
    %258 = vmatmul.mubr.f32.gmra.mrb[0].mxu0 %v257
    %v259 = vpop.f32.mrb[0].mxu0
    %v260 = vadd.f32 %v161, %v259
    %v261 = vpop.f32.mrb[0].mxu0
    %262 = vdwg.mxu0
    %263 = vmatprep.subr.mxu0 0.0
    %v264 = vand.u32 %v42, 4294901760
    %v265 = vsub.f32 %v42, %v264
    %266 = vmatpush1.msra.mxu0 %v265
    %267 = vmatprep.subr.mxu0 0.0
    %v268 = vand.u32 %v43, 4294901760
    %v269 = vsub.f32 %v43, %v268
    %270 = vmatpush1.msra.mxu0 %v269
    %271 = vmatprep.subr.mxu0 0.0
    %272 = vmatpush1.msra.mxu0 0.0
    %273 = vmatprep.subr.mxu0 0.0
    %274 = vmatpush1.msra.mxu0 0.0
    %275 = vmatprep.subr.mxu0 0.0
    %276 = vmatpush1.msra.mxu0 0.0
    %277 = vmatprep.subr.mxu0 0.0
    %278 = vmatpush1.msra.mxu0 0.0
    %279 = vmatprep.subr.mxu0 0.0
    %280 = vmatpush1.msra.mxu0 0.0
    %281 = vmatprep.subr.mxu0 0.0
    %282 = vmatpush1.msra.mxu0 0.0
    %283 = vmatprep.subr.mxu0 0.0
    %284 = vmatpush1.msra.mxu0 0.0
    %285 = vmatprep.subr.mxu0 0.0
    %286 = vmatpush1.msra.mxu0 0.0
    %287 = vmatprep.subr.mxu0 0.0
    %288 = vmatpush1.msra.mxu0 0.0
    %289 = vmatprep.subr.mxu0 0.0
    %290 = vmatpush1.msra.mxu0 0.0
    %291 = vmatprep.subr.mxu0 0.0
    %292 = vmatpush1.msra.mxu0 0.0
    %293 = vmatprep.subr.mxu0 0.0
    %294 = vmatpush1.msra.mxu0 0.0
    %295 = vmatprep.subr.mxu0 0.0
    %296 = vmatpush1.msra.mxu0 0.0
    %297 = vmatprep.subr.mxu0 0.0
    %298 = vmatpush1.msra.mxu0 0.0
    %299 = vmatprep.subr.mxu0 0.0
    %300 = vmatpush1.msra.mxu0 0.0
    %301 = vmatprep.subr.mxu0 0.0
    %302 = vmatpush1.msra.mxu0 0.0
    %303 = vmatprep.subr.mxu0 0.0
    %304 = vmatpush1.msra.mxu0 0.0
    %305 = vmatprep.subr.mxu0 0.0
    %306 = vmatpush1.msra.mxu0 0.0
    %307 = vmatprep.subr.mxu0 0.0
    %308 = vmatpush1.msra.mxu0 0.0
    %309 = vmatprep.subr.mxu0 0.0
    %310 = vmatpush1.msra.mxu0 0.0
    %311 = vmatprep.subr.mxu0 0.0
    %312 = vmatpush1.msra.mxu0 0.0
    %313 = vmatprep.subr.mxu0 0.0
    %314 = vmatpush1.msra.mxu0 0.0
    %315 = vmatprep.subr.mxu0 0.0
    %316 = vmatpush1.msra.mxu0 0.0
    %317 = vmatprep.subr.mxu0 0.0
    %318 = vmatpush1.msra.mxu0 0.0
    %319 = vmatprep.subr.mxu0 0.0
    %320 = vmatpush1.msra.mxu0 0.0
    %321 = vmatprep.subr.mxu0 0.0
    %322 = vmatpush1.msra.mxu0 0.0
    %323 = vmatprep.subr.mxu0 0.0
    %324 = vmatpush1.msra.mxu0 0.0
    %325 = vmatprep.subr.mxu0 0.0
    %326 = vmatpush1.msra.mxu0 0.0
    %327 = vmatprep.subr.mxu0 0.0
    %328 = vmatpush1.msra.mxu0 0.0
    %329 = vmatprep.subr.mxu0 0.0
    %330 = vmatpush1.msra.mxu0 0.0
    %331 = vmatprep.mubr.f32.mxu0 0.0
    %v332 = vand.u32 %v46, 4294901760
    %v333 = vsub.f32 %v46, %v332
    %334 = vmatmul.mubr.f32.gmra.mrb[0].mxu0 %v333
    %v335 = vpop.f32.mrb[0].mxu0
    %v336 = vadd.f32 %v242, %v335
    %v337 = vpop.f32.mrb[0].mxu0
    %338 = vmatprep.mubr.f32.mxu0 0.0
    %v339 = vand.u32 %v49, 4294901760
    %v340 = vsub.f32 %v49, %v339
    %341 = vmatmul.mubr.f32.gmra.mrb[0].mxu0 %v340
    %v342 = vpop.f32.mrb[0].mxu0
    %v343 = vadd.f32 %v248, %v342
    %v344 = vpop.f32.mrb[0].mxu0
    %345 = vmatprep.mubr.f32.mxu0 0.0
    %v346 = vand.u32 %v52, 4294901760
    %v347 = vsub.f32 %v52, %v346
    %348 = vmatmul.mubr.f32.gmra.mrb[0].mxu0 %v347
    %v349 = vpop.f32.mrb[0].mxu0
    %v350 = vadd.f32 %v254, %v349
    %v351 = vpop.f32.mrb[0].mxu0
    %352 = vmatprep.mubr.f32.mxu0 0.0
    %v353 = vand.u32 %v55, 4294901760
    %v354 = vsub.f32 %v55, %v353
    %355 = vmatmul.mubr.f32.gmra.mrb[0].mxu0 %v354
    %v356 = vpop.f32.mrb[0].mxu0
    %v357 = vadd.f32 %v260, %v356
    %v358 = vpop.f32.mrb[0].mxu0
    %359 = vdwg.mxu0
    %360 = vmatprep.subr.mxu0 0.0
    %v361 = vand.u32 %v42, 4294901760
    %362 = vmatpush1.msra.mxu0 %v361
    %363 = vmatprep.subr.mxu0 0.0
    %v364 = vand.u32 %v43, 4294901760
    %365 = vmatpush1.msra.mxu0 %v364
    %366 = vmatprep.subr.mxu0 0.0
    %367 = vmatpush1.msra.mxu0 0.0
    %368 = vmatprep.subr.mxu0 0.0
    %369 = vmatpush1.msra.mxu0 0.0
    %370 = vmatprep.subr.mxu0 0.0
    %371 = vmatpush1.msra.mxu0 0.0
    %372 = vmatprep.subr.mxu0 0.0
    %373 = vmatpush1.msra.mxu0 0.0
    %374 = vmatprep.subr.mxu0 0.0
    %375 = vmatpush1.msra.mxu0 0.0
    %376 = vmatprep.subr.mxu0 0.0
    %377 = vmatpush1.msra.mxu0 0.0
    %378 = vmatprep.subr.mxu0 0.0
    %379 = vmatpush1.msra.mxu0 0.0
    %380 = vmatprep.subr.mxu0 0.0
    %381 = vmatpush1.msra.mxu0 0.0
    %382 = vmatprep.subr.mxu0 0.0
    %383 = vmatpush1.msra.mxu0 0.0
    %384 = vmatprep.subr.mxu0 0.0
    %385 = vmatpush1.msra.mxu0 0.0
    %386 = vmatprep.subr.mxu0 0.0
    %387 = vmatpush1.msra.mxu0 0.0
    %388 = vmatprep.subr.mxu0 0.0
    %389 = vmatpush1.msra.mxu0 0.0
    %390 = vmatprep.subr.mxu0 0.0
    %391 = vmatpush1.msra.mxu0 0.0
    %392 = vmatprep.subr.mxu0 0.0
    %393 = vmatpush1.msra.mxu0 0.0
    %394 = vmatprep.subr.mxu0 0.0
    %395 = vmatpush1.msra.mxu0 0.0
    %396 = vmatprep.subr.mxu0 0.0
    %397 = vmatpush1.msra.mxu0 0.0
    %398 = vmatprep.subr.mxu0 0.0
    %399 = vmatpush1.msra.mxu0 0.0
    %400 = vmatprep.subr.mxu0 0.0
    %401 = vmatpush1.msra.mxu0 0.0
    %402 = vmatprep.subr.mxu0 0.0
    %403 = vmatpush1.msra.mxu0 0.0
    %404 = vmatprep.subr.mxu0 0.0
    %405 = vmatpush1.msra.mxu0 0.0
    %406 = vmatprep.subr.mxu0 0.0
    %407 = vmatpush1.msra.mxu0 0.0
    %408 = vmatprep.subr.mxu0 0.0
    %409 = vmatpush1.msra.mxu0 0.0
    %410 = vmatprep.subr.mxu0 0.0
    %411 = vmatpush1.msra.mxu0 0.0
    %412 = vmatprep.subr.mxu0 0.0
    %413 = vmatpush1.msra.mxu0 0.0
    %414 = vmatprep.subr.mxu0 0.0
    %415 = vmatpush1.msra.mxu0 0.0
    %416 = vmatprep.subr.mxu0 0.0
    %417 = vmatpush1.msra.mxu0 0.0
    %418 = vmatprep.subr.mxu0 0.0
    %419 = vmatpush1.msra.mxu0 0.0
    %420 = vmatprep.subr.mxu0 0.0
    %421 = vmatpush1.msra.mxu0 0.0
    %422 = vmatprep.subr.mxu0 0.0
    %423 = vmatpush1.msra.mxu0 0.0
    %424 = vmatprep.subr.mxu0 0.0
    %425 = vmatpush1.msra.mxu0 0.0
    %426 = vmatprep.mubr.f32.mxu0 0.0
    %v427 = vand.u32 %v46, 4294901760
    %v428 = vsub.f32 %v46, %v427
    %v429 = vand.u32 %v428, 4294901760
    %430 = vmatmul.mubr.f32.gmra.mrb[0].mxu0 %v429
    %v431 = vpop.f32.mrb[0].mxu0
    %v432 = vadd.f32 %v336, %v431
    %v433 = vpop.f32.mrb[0].mxu0
    %434 = vmatprep.mubr.f32.mxu0 0.0
    %v435 = vand.u32 %v49, 4294901760
    %v436 = vsub.f32 %v49, %v435
    %v437 = vand.u32 %v436, 4294901760
    %438 = vmatmul.mubr.f32.gmra.mrb[0].mxu0 %v437
    %v439 = vpop.f32.mrb[0].mxu0
    %v440 = vadd.f32 %v343, %v439
    %v441 = vpop.f32.mrb[0].mxu0
    %442 = vmatprep.mubr.f32.mxu0 0.0
    %v443 = vand.u32 %v52, 4294901760
    %v444 = vsub.f32 %v52, %v443
    %v445 = vand.u32 %v444, 4294901760
    %446 = vmatmul.mubr.f32.gmra.mrb[0].mxu0 %v445
    %v447 = vpop.f32.mrb[0].mxu0
    %v448 = vadd.f32 %v350, %v447
    %v449 = vpop.f32.mrb[0].mxu0
    %450 = vmatprep.mubr.f32.mxu0 0.0
    %v451 = vand.u32 %v55, 4294901760
    %v452 = vsub.f32 %v55, %v451
    %v453 = vand.u32 %v452, 4294901760
    %454 = vmatmul.mubr.f32.gmra.mrb[0].mxu0 %v453
    %v455 = vpop.f32.mrb[0].mxu0
    %v456 = vadd.f32 %v357, %v455
    %v457 = vpop.f32.mrb[0].mxu0
    %458 = vdwg.mxu0
    %459 = vmatprep.subr.mxu0 0.0
    %v460 = vand.u32 %v42, 4294901760
    %v461 = vsub.f32 %v42, %v460
    %v462 = vand.u32 %v461, 4294901760
    %463 = vmatpush1.msra.mxu0 %v462
    %464 = vmatprep.subr.mxu0 0.0
    %v465 = vand.u32 %v43, 4294901760
    %v466 = vsub.f32 %v43, %v465
    %v467 = vand.u32 %v466, 4294901760
    %468 = vmatpush1.msra.mxu0 %v467
    %469 = vmatprep.subr.mxu0 0.0
    %470 = vmatpush1.msra.mxu0 0.0
    %471 = vmatprep.subr.mxu0 0.0
    %472 = vmatpush1.msra.mxu0 0.0
    %473 = vmatprep.subr.mxu0 0.0
    %474 = vmatpush1.msra.mxu0 0.0
    %475 = vmatprep.subr.mxu0 0.0
    %476 = vmatpush1.msra.mxu0 0.0
    %477 = vmatprep.subr.mxu0 0.0
    %478 = vmatpush1.msra.mxu0 0.0
    %479 = vmatprep.subr.mxu0 0.0
    %480 = vmatpush1.msra.mxu0 0.0
    %481 = vmatprep.subr.mxu0 0.0
    %482 = vmatpush1.msra.mxu0 0.0
    %483 = vmatprep.subr.mxu0 0.0
    %484 = vmatpush1.msra.mxu0 0.0
    %485 = vmatprep.subr.mxu0 0.0
    %486 = vmatpush1.msra.mxu0 0.0
    %487 = vmatprep.subr.mxu0 0.0
    %488 = vmatpush1.msra.mxu0 0.0
    %489 = vmatprep.subr.mxu0 0.0
    %490 = vmatpush1.msra.mxu0 0.0
    %491 = vmatprep.subr.mxu0 0.0
    %492 = vmatpush1.msra.mxu0 0.0
    %493 = vmatprep.subr.mxu0 0.0
    %494 = vmatpush1.msra.mxu0 0.0
    %495 = vmatprep.subr.mxu0 0.0
    %496 = vmatpush1.msra.mxu0 0.0
    %497 = vmatprep.subr.mxu0 0.0
    %498 = vmatpush1.msra.mxu0 0.0
    %499 = vmatprep.subr.mxu0 0.0
    %500 = vmatpush1.msra.mxu0 0.0
    %501 = vmatprep.subr.mxu0 0.0
    %502 = vmatpush1.msra.mxu0 0.0
    %503 = vmatprep.subr.mxu0 0.0
    %504 = vmatpush1.msra.mxu0 0.0
    %505 = vmatprep.subr.mxu0 0.0
    %506 = vmatpush1.msra.mxu0 0.0
    %507 = vmatprep.subr.mxu0 0.0
    %508 = vmatpush1.msra.mxu0 0.0
    %509 = vmatprep.subr.mxu0 0.0
    %510 = vmatpush1.msra.mxu0 0.0
    %511 = vmatprep.subr.mxu0 0.0
    %512 = vmatpush1.msra.mxu0 0.0
    %513 = vmatprep.subr.mxu0 0.0
    %514 = vmatpush1.msra.mxu0 0.0
    %515 = vmatprep.subr.mxu0 0.0
    %516 = vmatpush1.msra.mxu0 0.0
    %517 = vmatprep.subr.mxu0 0.0
    %518 = vmatpush1.msra.mxu0 0.0
    %519 = vmatprep.subr.mxu0 0.0
    %520 = vmatpush1.msra.mxu0 0.0
    %521 = vmatprep.subr.mxu0 0.0
    %522 = vmatpush1.msra.mxu0 0.0
    %523 = vmatprep.subr.mxu0 0.0
    %524 = vmatpush1.msra.mxu0 0.0
    %525 = vmatprep.subr.mxu0 0.0
    %526 = vmatpush1.msra.mxu0 0.0
    %527 = vmatprep.subr.mxu0 0.0
    %528 = vmatpush1.msra.mxu0 0.0
    %529 = vmatprep.mubr.f32.mxu0 0.0
    %v530 = vand.u32 %v46, 4294901760
    %531 = vmatmul.mubr.f32.gmra.mrb[0].mxu0 %v530
    %v532 = vpop.f32.mrb[0].mxu0
    %v533 = vadd.f32 %v432, %v532
    %v534 = vpop.f32.mrb[0].mxu0
    %535 = vmatprep.mubr.f32.mxu0 0.0
    %v536 = vand.u32 %v49, 4294901760
    %537 = vmatmul.mubr.f32.gmra.mrb[0].mxu0 %v536
    %v538 = vpop.f32.mrb[0].mxu0
    %v539 = vadd.f32 %v440, %v538
    %v540 = vpop.f32.mrb[0].mxu0
    %541 = vmatprep.mubr.f32.mxu0 0.0
    %v542 = vand.u32 %v52, 4294901760
    %543 = vmatmul.mubr.f32.gmra.mrb[0].mxu0 %v542
    %v544 = vpop.f32.mrb[0].mxu0
    %v545 = vadd.f32 %v448, %v544
    %v546 = vpop.f32.mrb[0].mxu0
    %547 = vmatprep.mubr.f32.mxu0 0.0
    %v548 = vand.u32 %v55, 4294901760
    %549 = vmatmul.mubr.f32.gmra.mrb[0].mxu0 %v548
    %v550 = vpop.f32.mrb[0].mxu0
    %v551 = vadd.f32 %v456, %v550
    %v552 = vpop.f32.mrb[0].mxu0
    %553 = vdwg.mxu0
    %554 = vmatprep.subr.mxu0 0.0
    %v555 = vand.u32 %v42, 4294901760
    %556 = vmatpush1.msra.mxu0 %v555
    %557 = vmatprep.subr.mxu0 0.0
    %v558 = vand.u32 %v43, 4294901760
    %559 = vmatpush1.msra.mxu0 %v558
    %560 = vmatprep.subr.mxu0 0.0
    %561 = vmatpush1.msra.mxu0 0.0
    %562 = vmatprep.subr.mxu0 0.0
    %563 = vmatpush1.msra.mxu0 0.0
    %564 = vmatprep.subr.mxu0 0.0
    %565 = vmatpush1.msra.mxu0 0.0
    %566 = vmatprep.subr.mxu0 0.0
    %567 = vmatpush1.msra.mxu0 0.0
    %568 = vmatprep.subr.mxu0 0.0
    %569 = vmatpush1.msra.mxu0 0.0
    %570 = vmatprep.subr.mxu0 0.0
    %571 = vmatpush1.msra.mxu0 0.0
    %572 = vmatprep.subr.mxu0 0.0
    %573 = vmatpush1.msra.mxu0 0.0
    %574 = vmatprep.subr.mxu0 0.0
    %575 = vmatpush1.msra.mxu0 0.0
    %576 = vmatprep.subr.mxu0 0.0
    %577 = vmatpush1.msra.mxu0 0.0
    %578 = vmatprep.subr.mxu0 0.0
    %579 = vmatpush1.msra.mxu0 0.0
    %580 = vmatprep.subr.mxu0 0.0
    %581 = vmatpush1.msra.mxu0 0.0
    %582 = vmatprep.subr.mxu0 0.0
    %583 = vmatpush1.msra.mxu0 0.0
    %584 = vmatprep.subr.mxu0 0.0
    %585 = vmatpush1.msra.mxu0 0.0
    %586 = vmatprep.subr.mxu0 0.0
    %587 = vmatpush1.msra.mxu0 0.0
    %588 = vmatprep.subr.mxu0 0.0
    %589 = vmatpush1.msra.mxu0 0.0
    %590 = vmatprep.subr.mxu0 0.0
    %591 = vmatpush1.msra.mxu0 0.0
    %592 = vmatprep.subr.mxu0 0.0
    %593 = vmatpush1.msra.mxu0 0.0
    %594 = vmatprep.subr.mxu0 0.0
    %595 = vmatpush1.msra.mxu0 0.0
    %596 = vmatprep.subr.mxu0 0.0
    %597 = vmatpush1.msra.mxu0 0.0
    %598 = vmatprep.subr.mxu0 0.0
    %599 = vmatpush1.msra.mxu0 0.0
    %600 = vmatprep.subr.mxu0 0.0
    %601 = vmatpush1.msra.mxu0 0.0
    %602 = vmatprep.subr.mxu0 0.0
    %603 = vmatpush1.msra.mxu0 0.0
    %604 = vmatprep.subr.mxu0 0.0
    %605 = vmatpush1.msra.mxu0 0.0
    %606 = vmatprep.subr.mxu0 0.0
    %607 = vmatpush1.msra.mxu0 0.0
    %608 = vmatprep.subr.mxu0 0.0
    %609 = vmatpush1.msra.mxu0 0.0
    %610 = vmatprep.subr.mxu0 0.0
    %611 = vmatpush1.msra.mxu0 0.0
    %612 = vmatprep.subr.mxu0 0.0
    %613 = vmatpush1.msra.mxu0 0.0
    %614 = vmatprep.subr.mxu0 0.0
    %615 = vmatpush1.msra.mxu0 0.0
    %616 = vmatprep.subr.mxu0 0.0
    %617 = vmatpush1.msra.mxu0 0.0
    %618 = vmatprep.subr.mxu0 0.0
    %619 = vmatpush1.msra.mxu0 0.0
    %620 = vmatprep.mubr.f32.mxu0 0.0
    %v621 = vand.u32 %v46, 4294901760
    %622 = vmatmul.mubr.f32.gmra.mrb[0].mxu0 %v621
    %v623 = vpop.f32.mrb[0].mxu0
    %v624 = vadd.f32 %v533, %v623
    %v625 = vpop.f32.mrb[0].mxu0
    %626 = vmatprep.mubr.f32.mxu0 0.0
    %v627 = vand.u32 %v49, 4294901760
    %628 = vmatmul.mubr.f32.gmra.mrb[0].mxu0 %v627
    %v629 = vpop.f32.mrb[0].mxu0
    %v630 = vadd.f32 %v539, %v629
    %v631 = vpop.f32.mrb[0].mxu0
    %632 = vmatprep.mubr.f32.mxu0 0.0
    %v633 = vand.u32 %v52, 4294901760
    %634 = vmatmul.mubr.f32.gmra.mrb[0].mxu0 %v633
    %v635 = vpop.f32.mrb[0].mxu0
    %v636 = vadd.f32 %v545, %v635
    %v637 = vpop.f32.mrb[0].mxu0
    %638 = vmatprep.mubr.f32.mxu0 0.0
    %v639 = vand.u32 %v55, 4294901760
    %640 = vmatmul.mubr.f32.gmra.mrb[0].mxu0 %v639
    %v641 = vpop.f32.mrb[0].mxu0
    %v642 = vadd.f32 %v551, %v641
    %v643 = vpop.f32.mrb[0].mxu0
    %644 = vdwg.mxu0
    %vm645 = vcmask 261120
    %646 = vst.msk [vmem:[#allocation2] sm:$0xff] %vm645, %v624
    %647 = vst.msk [vmem:[#allocation2 + $0x8] sm:$0xff] %vm645, %v630
    %648 = vst.msk [vmem:[#allocation2 + $0x10] sm:$0xff] %vm645, %v636
    %649 = vst.msk [vmem:[#allocation2 + $0x18] sm:$0xff] %vm645, %v642
    // Predicated region
    $region10: #{tpu_custom_call.1} parent=1 // pred_check
      _
    $region11: #{tpu_custom_call.1} parent=1 // pred_check_branch
      %651 = sbr.rel (0) target = $region13
    $region12: #{tpu_custom_call.1} parent=1 // pred_region
      %s653 = ssub.s32 512, 512
      %654 = vsyncadd [#allocation3], %s653
      %s655 = sshll.u32 [#allocation2], 4
      %s656 = int_to_ptr.vmem [resolvable:$true] %s655
      %661 = dma.vmem_to_hbm [thread:$0]  %s656, 512, %s2, [#allocation3], 128, 128, 8
    $region13: #{tpu_custom_call.1} parent=1 // pred_fallthru
      _
    // Predicated region
    $region14: #{tpu_custom_call.1} parent=1 // pred_check
      _
    $region15: #{tpu_custom_call.1} parent=1 // pred_check_branch
      %663 = sbr.rel (0) target = $region17
    $region16: #{tpu_custom_call.1} parent=1 // pred_region
      %664 = dma.done [#allocation3], 512
    $region17: #{tpu_custom_call.1} parent=1 // pred_fallthru
      _
    %665 = vsyncpa [#allocation3], 1

</llo_original>
